<compile_context>
chip_gen: v6e
topology: v6e:2x2x1
jax: 0.10.0
libtpu: 0.0.40
codegen_flags: <defaults>
</compile_context>

<pallas_src>
import functools

import jax
import jax.numpy as jnp
from jax import lax
from jax.experimental import pallas as pl
from jax.experimental.pallas import tpu as pltpu

BN_EPS = 1e-5
_LANE = 128                      # lane width == batch-tile granularity
_SINGLE_BLOCK_MAX_COLS = 2048    # above this, use the tiled 3-pass path
_FUSE_W23_MAX = 128              # conservative MXU-N bound (v5e); 2H above -> split dots
_NC = 2                          # core-split factor for the stats passes (v7x megacore)


def _round_up(x, m):
    return ((x + m - 1) // m) * m


def _vmem_budget_bytes():
    """Generation-aware VMEM budget (v7x: 64 MiB physical; v5e/v6e: 128 MiB)."""
    cap = 128 * 1024 * 1024
    try:
        cap = int(getattr(pltpu.get_tpu_info(), "vmem_capacity_bytes", cap))
    except Exception:   # no TPU visible at trace time / interpret mode
        pass
    return min(cap // 2, 64 * 1024 * 1024)


def _vmem_tile_cap_cols(D, H2, with_logdet, budget):
    """Max batch-tile width (lanes) from the real per-column VMEM footprint:
    double-buffered x/y (+ldj) blocks plus the live (feature, bt) intermediates
    (h1, h2, st, a few D-row temps).  The transposed layout is lane-dense, so
    no 8x lane-padding slack needs to be added."""
    bytes_per_col = 4 * (4 * D + (4 if with_logdet else 0)
                         + 3 * H2 + 2 * (2 * D) + 3 * D)
    cap = (budget * 3 // 5) // max(bytes_per_col, 1)
    return max(_LANE, (min(cap, 32768) // _LANE) * _LANE)


# ---------------------------------------------------------------------------
# In-kernel helpers (transposed layout: arrays are (features, batch_columns))
# ---------------------------------------------------------------------------
def _matT(w, h):
    return jnp.dot(w, h, preferred_element_type=jnp.float32)


def _bn_cols(h, gamma, beta, mean, var):
    return (h - mean) * lax.rsqrt(var + BN_EPS) * gamma + beta


def _layer1(x, w1_ref, colh_ref, cold_ref, D):
    """masked input -> fused Linear1 -> ReLU.  Returns (h1, mask_column)."""
    mask = cold_ref[:D, 2:3]                               # (D, 1)
    xm = x * mask                                          # apply_mask(x, mask)
    h = jnp.maximum(_matT(w1_ref[...], xm) + colh_ref[:, 0:1], 0.0)
    return h, mask


def _layer2(h, w2_ref, colh_ref, split, H):
    """fused (block-diag) or split Linear2 -> ReLU."""
    if split:
        h = jnp.concatenate([_matT(w2_ref[0], h[:H, :]),
                             _matT(w2_ref[1], h[H:, :])], axis=0)
    else:
        h = _matT(w2_ref[...], h)
    return jnp.maximum(h + colh_ref[:, 3:4], 0.0)


def _layer3_and_couple(reverse, with_logdet, split, D, H,
                       x, mask, h2, w3_ref, cold_ref, out_refs):
    """Linear3 -> split s|t -> tanh/rescale/mask -> affine coupling -> stores."""
    b3 = cold_ref[:, 0:1]                                  # (2D, 1)
    rescale = cold_ref[:D, 1:2]                            # (D, 1)
    if split:
        s_lin = _matT(w3_ref[0], h2[:H, :]) + b3[:D]
        t = _matT(w3_ref[1], h2[H:, :]) + b3[D:]
    else:
        st = _matT(w3_ref[...], h2) + b3                   # (2D, bt) = [s ; t]
        s_lin = st[:D, :]
        t = st[D:, :]
    inv_mask = 1.0 - mask
    s = jnp.tanh(s_lin) * rescale * inv_mask               # rescale(tanh(s)) * (1-mask)
    t = t * inv_mask
    y_ref = out_refs[0]
    if reverse:
        y_ref[...] = x * jnp.exp(-s) - t
    else:
        y_ref[...] = x * jnp.exp(s) + t
    if with_logdet:
        # per-sample log-det: sublane reduction over features -> lane-dense (1, bt)
        out_refs[1][...] = jnp.sum(s, axis=0, keepdims=True)


def _mean_var_from_partials(st_ref, inv_b):
    """Combine per-core partial (sum, sumsq) slabs and finalize mean/var
    in-kernel (no intervening XLA ops between the three passes)."""
    sums = st_ref[0]
    for c in range(1, st_ref.shape[0]):
        sums = sums + st_ref[c]
    mean = sums[:, 0:1] * inv_b
    var = jnp.maximum(sums[:, 1:2] * inv_b - mean * mean, 0.0)
    return mean, var


# ---------------------------------------------------------------------------
# Kernel 1: whole (padded) batch in one VMEM block, exact centered BN stats
# ---------------------------------------------------------------------------
def _single_block_kernel(reverse, with_logdet, split, D, H, B, Bp,
                         x_ref, w1_ref, colh_ref, w2_ref, w3_ref, cold_ref,
                         *out_refs):
    x = x_ref[...]
    inv_b = 1.0 / B
    if Bp != B:
        cols = lax.broadcasted_iota(jnp.int32, (1, Bp), 1)
        valid = (cols < B).astype(jnp.float32)
    else:
        valid = None

    def bn(h, gamma, beta):
        hv = h if valid is None else h * valid
        m = jnp.sum(hv, axis=1, keepdims=True) * inv_b
        c = h - m
        cv = c if valid is None else c * valid
        v = jnp.sum(cv * cv, axis=1, keepdims=True) * inv_b
        return _bn_cols(h, gamma, beta, m, v)

    h, mask = _layer1(x, w1_ref, colh_ref, cold_ref, D)
    h = bn(h, colh_ref[:, 1:2], colh_ref[:, 2:3])
    h = _layer2(h, w2_ref, colh_ref, split, H)
    h = bn(h, colh_ref[:, 4:5], colh_ref[:, 5:6])
    _layer3_and_couple(reverse, with_logdet, split, D, H, x, mask, h,
                       w3_ref, cold_ref, out_refs)


# ---------------------------------------------------------------------------
# Kernels 2-4: batch-tiled path preserving full-batch BN statistics
# ---------------------------------------------------------------------------
def _stats1_kernel(D, B, bt, nt,
                   x_ref, w1_ref, colh_ref, w2_ref, w3_ref, cold_ref, st_ref):
    """Per-core partial sum / sum-of-squares of h1 over valid batch columns."""
    i = pl.program_id(1)

    @pl.when(i == 0)
    def _init():
        st_ref[...] = jnp.zeros_like(st_ref)

    tile = pl.program_id(0) * nt + i
    cols = lax.broadcasted_iota(jnp.int32, (1, bt), 1) + tile * bt
    valid = (cols < B).astype(jnp.float32)          # padded / clamped-dup lanes -> 0
    h, _ = _layer1(x_ref[...], w1_ref, colh_ref, cold_ref, D)
    hv = h * valid
    st_ref[...] += jnp.concatenate(
        [jnp.sum(hv, axis=1, keepdims=True),
         jnp.sum(hv * h, axis=1, keepdims=True)], axis=1)[None]


def _stats2_kernel(split, D, H, B, bt, nt,
                   x_ref, w1_ref, colh_ref, w2_ref, w3_ref, cold_ref,
                   st1_ref, st_ref):
    """Per-core partial sum / sum-of-squares of h2 (needs BN1 stats)."""
    i = pl.program_id(1)

    @pl.when(i == 0)
    def _init():
        st_ref[...] = jnp.zeros_like(st_ref)

    tile = pl.program_id(0) * nt + i
    cols = lax.broadcasted_iota(jnp.int32, (1, bt), 1) + tile * bt
    valid = (cols < B).astype(jnp.float32)
    m1, v1 = _mean_var_from_partials(st1_ref, 1.0 / B)
    h, _ = _layer1(x_ref[...], w1_ref, colh_ref, cold_ref, D)
    h = _bn_cols(h, colh_ref[:, 1:2], colh_ref[:, 2:3], m1, v1)
    h = _layer2(h, w2_ref, colh_ref, split, H)
    hv = h * valid
    st_ref[...] += jnp.concatenate(
        [jnp.sum(hv, axis=1, keepdims=True),
         jnp.sum(hv * h, axis=1, keepdims=True)], axis=1)[None]


def _apply_kernel(reverse, with_logdet, split, D, H, B,
                  x_ref, w1_ref, colh_ref, w2_ref, w3_ref, cold_ref,
                  st1_ref, st2_ref, *out_refs):
    """Final pass: full MLP + coupling with precomputed full-batch BN stats."""
    inv_b = 1.0 / B
    m1, v1 = _mean_var_from_partials(st1_ref, inv_b)
    m2, v2 = _mean_var_from_partials(st2_ref, inv_b)
    x = x_ref[...]
    h, mask = _layer1(x, w1_ref, colh_ref, cold_ref, D)
    h = _bn_cols(h, colh_ref[:, 1:2], colh_ref[:, 2:3], m1, v1)
    h = _layer2(h, w2_ref, colh_ref, split, H)
    h = _bn_cols(h, colh_ref[:, 4:5], colh_ref[:, 5:6], m2, v2)
    _layer3_and_couple(reverse, with_logdet, split, D, H, x, mask, h,
                       w3_ref, cold_ref, out_refs)


# ---------------------------------------------------------------------------
# Wrapper
# ---------------------------------------------------------------------------
def realnvp_coupling_forward(x, fused_params, reverse=True, log_det_jacobian=None,
                             block_b=None):
    B, D = x.shape
    w1, colh, w2, w3, cold = fused_params
    H2 = w1.shape[0]
    H = H2 // 2
    split = (w2.ndim == 3)                           # wide-hidden (non-fused W2/W3)
    with_logdet = (not reverse) and (log_det_jacobian is not None)
    n_out = 2 if with_logdet else 1

    budget = _vmem_budget_bytes()
    cap_cols = _vmem_tile_cap_cols(D, H2, with_logdet, budget)

    # batch-on-lanes layout: every DMA / store below is lane-dense.
    xT = jnp.transpose(x.astype(jnp.float32))        # (D, B)
    params = (w1, colh, w2, w3, cold)

    def out_shapes(bp):
        shapes = [jax.ShapeDtypeStruct((D, bp), jnp.float32)]
        if with_logdet:
            shapes.append(jax.ShapeDtypeStruct((1, bp), jnp.float32))
        return tuple(shapes)

    def full_spec(shape):
        nd = len(shape)
        return pl.BlockSpec(shape, lambda *_: (0,) * nd)

    Bp_min = _round_up(B, _LANE)

    if block_b is None and Bp_min <= min(_SINGLE_BLOCK_MAX_COLS, cap_cols):
        # ---- small batch: one fused kernel, exact centered in-kernel BN -----
        Bp = Bp_min
        xT_p = xT if Bp == B else jnp.pad(xT, ((0, 0), (0, Bp - B)))
        vmem = lambda: pl.BlockSpec(memory_space=pltpu.MemorySpace.VMEM)
        outs = pl.pallas_call(
            functools.partial(_single_block_kernel, reverse, with_logdet, split,
                              D, H, B, Bp),
            out_shape=out_shapes(Bp),
            in_specs=[vmem() for _ in range(6)],
            out_specs=tuple(vmem() for _ in range(n_out)),
            compiler_params=pltpu.CompilerParams(vmem_limit_bytes=budget),
        )(xT_p, *params)
    else:
        # ---- large batch: 3-pass tiled pipeline, full-batch BN statistics ---
        if block_b is not None:
            bt = min(max(_LANE, _round_up(int(block_b), _LANE)), cap_cols)
        else:
            bt = min(cap_cols, max(_LANE, _round_up(pl.cdiv(B, 4), _LANE)))
        Bp = _round_up(B, bt)
        nb = Bp // bt
        nt = pl.cdiv(nb, _NC)
        xT_p = xT if Bp == B else jnp.pad(xT, ((0, 0), (0, Bp - B)))

        # stats passes: 2-D grid (core, tile); the leading "parallel" axis lets
        # v7x's second TensorCore take half the tiles; out-of-range tiles on the
        # tail core are clamped in the index_map and zeroed by the lane mask.
        x_stat_spec = lambda: pl.BlockSpec(
            (D, bt), lambda c, i: (0, jnp.minimum(c * nt + i, nb - 1)))
        stats_out_spec = lambda: pl.BlockSpec((1, H2, 2), lambda c, i: (c, 0, 0))
        stats_cp = pltpu.CompilerParams(
            dimension_semantics=("parallel", "arbitrary"),
            vmem_limit_bytes=budget)
        stats_shape = jax.ShapeDtypeStruct((_NC, H2, 2), jnp.float32)

        st1 = pl.pallas_call(
            functools.partial(_stats1_kernel, D, B, bt, nt),
            out_shape=stats_shape,
            grid=(_NC, nt),
            in_specs=[x_stat_spec()] + [full_spec(a.shape) for a in params],
            out_specs=stats_out_spec(),
            compiler_params=stats_cp,
        )(xT_p, *params)

        st2 = pl.pallas_call(
            functools.partial(_stats2_kernel, split, D, H, B, bt, nt),
            out_shape=stats_shape,
            grid=(_NC, nt),
            in_specs=([x_stat_spec()] + [full_spec(a.shape) for a in params]
                      + [full_spec(st1.shape)]),
            out_specs=stats_out_spec(),
            compiler_params=stats_cp,
        )(xT_p, *params, st1)

        out_specs = [pl.BlockSpec((D, bt), lambda i: (0, i))]
        if with_logdet:
            out_specs.append(pl.BlockSpec((1, bt), lambda i: (0, i)))
        outs = pl.pallas_call(
            functools.partial(_apply_kernel, reverse, with_logdet, split, D, H, B),
            out_shape=out_shapes(Bp),
            grid=(nb,),
            in_specs=([pl.BlockSpec((D, bt), lambda i: (0, i))]
                      + [full_spec(a.shape) for a in params]
                      + [full_spec(st1.shape), full_spec(st2.shape)]),
            out_specs=tuple(out_specs),
            compiler_params=pltpu.CompilerParams(
                dimension_semantics=("parallel",), vmem_limit_bytes=budget),
        )(xT_p, *params, st1, st2)

    if not isinstance(outs, (list, tuple)):
        outs = (outs,)
    y = jnp.transpose(outs[0][:, :B])
    if with_logdet:
        log_det_jacobian = log_det_jacobian + outs[1][0, :B]
    return y, log_det_jacobian


# ---------------------------------------------------------------------------
# Parameter init (mimics the PyTorch module's init) + fusion into kernel slabs
# ---------------------------------------------------------------------------
def _xavier_uniform(key, fan_in, fan_out):
    limit = (6.0 / (fan_in + fan_out)) ** 0.5
    return jax.random.uniform(key, (fan_in, fan_out), jnp.float32, -limit, limit)


def _init_net(key, D, H):
    k1, k2, k3 = jax.random.split(key, 3)
    return {
        "W1": _xavier_uniform(k1, D, H), "b1": jnp.zeros((H,), jnp.float32),
        "g1": jnp.ones((H,), jnp.float32), "be1": jnp.zeros((H,), jnp.float32),
        "W2": _xavier_uniform(k2, H, H), "b2": jnp.zeros((H,), jnp.float32),
        "g2": jnp.ones((H,), jnp.float32), "be2": jnp.zeros((H,), jnp.float32),
        "W3": _xavier_uniform(k3, H, D), "b3": jnp.zeros((D,), jnp.float32),
    }


def init_coupling_params(key, input_dim, hidden_dim):
    ks, kt = jax.random.split(key)
    return {
        "scale": _init_net(ks, input_dim, hidden_dim),
        "translate": _init_net(kt, input_dim, hidden_dim),
        # TODO(synk): DataRescale + weight_norm source not provided; modeled as a
        # per-feature scale with the weight-norm parametrization folded into one
        # effective vector (== ones at init).
        "rescale": jnp.ones((input_dim,), jnp.float32),
    }


def fuse_params(raw, mask_row):
    """Fuse scale/translate nets and pack parameters into transposed slabs."""
    s, t = raw["scale"], raw["translate"]
    D, H = s["W1"].shape
    H2 = 2 * H
    split = H2 > _FUSE_W23_MAX
    w1 = jnp.concatenate([s["W1"], t["W1"]], axis=1).T                 # (2H, D)
    colh = jnp.stack([                                                 # (2H, 8)
        jnp.concatenate([s["b1"], t["b1"]]),
        jnp.concatenate([s["g1"], t["g1"]]),
        jnp.concatenate([s["be1"], t["be1"]]),
        jnp.concatenate([s["b2"], t["b2"]]),
        jnp.concatenate([s["g2"], t["g2"]]),
        jnp.concatenate([s["be2"], t["be2"]]),
        jnp.zeros((H2,), jnp.float32),
        jnp.zeros((H2,), jnp.float32),
    ], axis=1).astype(jnp.float32)
    if split:
        w2 = jnp.stack([s["W2"].T, t["W2"].T])                         # (2, H, H)
        w3 = jnp.stack([s["W3"].T, t["W3"].T])                         # (2, D, H)
    else:
        zhh = jnp.zeros((H, H), jnp.float32)
        w2 = jnp.concatenate(
            [jnp.concatenate([s["W2"], zhh], axis=1),
             jnp.concatenate([zhh, t["W2"]], axis=1)], axis=0).T       # (2H, 2H)
        zhd = jnp.zeros((H, D), jnp.float32)
        w3 = jnp.concatenate(
            [jnp.concatenate([s["W3"], zhd], axis=1),
             jnp.concatenate([zhd, t["W3"]], axis=1)], axis=0).T       # (2D, 2H)
    zd = jnp.zeros((D,), jnp.float32)
    cold = jnp.stack([                                                 # (2D, 4)
        jnp.concatenate([s["b3"], t["b3"]]),
        jnp.concatenate([raw["rescale"], zd]),
        jnp.concatenate([mask_row.astype(jnp.float32), zd]),
        jnp.zeros((2 * D,), jnp.float32),
    ], axis=1).astype(jnp.float32)
    return (w1.astype(jnp.float32), colh, w2.astype(jnp.float32),
            w3.astype(jnp.float32), cold)


# TODO(synk): mask-builder sources not provided; modeled as per-feature rows
# broadcast over the batch (the common RealNVP convention).
def create_checkerboard_mask(width):
    return (jnp.arange(width) % 2 == 0).astype(jnp.float32)


def create_half_split_mask(width, reverse_simple_mask):
    row = (jnp.arange(width) < width // 2).astype(jnp.float32)
    return 1.0 - row if reverse_simple_mask else row


# ---------------------------------------------------------------------------
# Pure-JAX reference (unfused, full-batch training-mode BN) for verification
# ---------------------------------------------------------------------------
def reference_forward(x, raw, mask_row, reverse=True, log_det_jacobian=None):
    def mlp(xin, p):
        h = jnp.maximum(xin @ p["W1"] + p["b1"], 0.0)
        m = jnp.mean(h, axis=0)
        v = jnp.mean((h - m) ** 2, axis=0)
        h = (h - m) / jnp.sqrt(v + BN_EPS) * p["g1"] + p["be1"]
        h = jnp.maximum(h @ p["W2"] + p["b2"], 0.0)
        m = jnp.mean(h, axis=0)
        v = jnp.mean((h - m) ** 2, axis=0)
        h = (h - m) / jnp.sqrt(v + BN_EPS) * p["g2"] + p["be2"]
        return h @ p["W3"] + p["b3"]

    mask = mask_row[None, :]
    xm = x * mask
    s = mlp(xm, raw["scale"])
    t = mlp(xm, raw["translate"])
    s = jnp.tanh(s) * raw["rescale"][None, :]
    inv = 1.0 - mask
    s = s * inv
    t = t * inv
    if reverse:
        y = x * jnp.exp(-s) - t
    else:
        y = x * jnp.exp(s) + t
        if log_det_jacobian is not None:
            log_det_jacobian = log_det_jacobian + jnp.sum(s, axis=1)
    return y, log_det_jacobian


# ---------------------------------------------------------------------------
if __name__ == "__main__":
    key = jax.random.PRNGKey(0)
    kx, kp, kx2, kp3, kx3 = jax.random.split(key, 5)
    tol = dict(atol=2e-3, rtol=2e-3)

    # --- config 1: tiny batch -> single fused kernel, exact in-kernel BN -----
    batch, input_dim, hidden_dim = 8, 16, 32
    raw = init_coupling_params(kp, input_dim, hidden_dim)
    mask_row = create_checkerboard_mask(input_dim)           # mask_type='checkerboard'
    fused = fuse_params(raw, mask_row)
    x = jax.random.normal(kx, (batch, input_dim), jnp.float32)

    y_rev, _ = realnvp_coupling_forward(x, fused, reverse=True)
    y_rev_ref, _ = reference_forward(x, raw, mask_row, reverse=True)

    ldj0 = jnp.zeros((batch,), jnp.float32)
    y_fwd, ldj = realnvp_coupling_forward(x, fused, reverse=False,
                                          log_det_jacobian=ldj0)
    y_fwd_ref, ldj_ref = reference_forward(x, raw, mask_row, reverse=False,
                                           log_det_jacobian=ldj0)

    # --- config 2: larger batch -> tiled 3-pass pipeline (padding, masking,
    #               core-split stats grid, parallel apply pass) --------------
    B2 = 2500
    x2 = jax.random.normal(kx2, (B2, input_dim), jnp.float32)
    y2_rev, _ = realnvp_coupling_forward(x2, fused, reverse=True, block_b=512)
    y2_rev_ref, _ = reference_forward(x2, raw, mask_row, reverse=True)
    ldj2_0 = jnp.zeros((B2,), jnp.float32)
    y2_fwd, ldj2 = realnvp_coupling_forward(x2, fused, reverse=False,
                                            log_det_jacobian=ldj2_0, block_b=512)
    y2_fwd_ref, ldj2_ref = reference_forward(x2, raw, mask_row, reverse=False,
                                             log_det_jacobian=ldj2_0)

    # --- config 3: wide hidden (2H > 128) -> split (non-block-diag) W2/W3 ----
    hidden3 = 96
    raw3 = init_coupling_params(kp3, input_dim, hidden3)
    mask_row3 = create_half_split_mask(input_dim, reverse_simple_mask=False)
    fused3 = fuse_params(raw3, mask_row3)
    x3 = jax.random.normal(kx3, (batch, input_dim), jnp.float32)
    y3, _ = realnvp_coupling_forward(x3, fused3, reverse=True)
    y3_ref, _ = reference_forward(x3, raw3, mask_row3, reverse=True)

    jax.block_until_ready((y_rev, y_fwd, ldj, y2_rev, y2_fwd, ldj2, y3))

    assert y_rev.shape == (batch, input_dim)
    assert y_fwd.shape == (batch, input_dim)
    assert ldj.shape == (batch,)
    checks = [
        ("y_rev", y_rev, y_rev_ref), ("y_fwd", y_fwd, y_fwd_ref),
        ("ldj", ldj, ldj_ref),
        ("y2_rev", y2_rev, y2_rev_ref), ("y2_fwd", y2_fwd, y2_fwd_ref),
        ("ldj2", ldj2, ldj2_ref),
        ("y3", y3, y3_ref),
    ]
    for name, got, want in checks:
        assert bool(jnp.allclose(got, want, **tol)), f"mismatch vs reference: {name}"
    print("KERNEL_OK")
</pallas_src>

<mosaic_0001>
module attributes {stable_mosaic.version = 11 : i64} {
  func.func @_single_block_kernel(%arg0: memref<16x128xf32, #tpu.memory_space<vmem>>, %arg1: memref<64x16xf32, #tpu.memory_space<vmem>>, %arg2: memref<64x8xf32, #tpu.memory_space<vmem>>, %arg3: memref<64x64xf32, #tpu.memory_space<vmem>>, %arg4: memref<32x64xf32, #tpu.memory_space<vmem>>, %arg5: memref<32x4xf32, #tpu.memory_space<vmem>>, %arg6: memref<16x128xf32, #tpu.memory_space<vmem>>) attributes {dimension_semantics = [], scalar_prefetch = 0 : i64, scratch_operands = 0 : i64, tpu.core_type = #tpu.core_type<tc>} {
    %c0 = arith.constant 0 : index
    %c0_0 = arith.constant 0 : index
    %0 = vector.load %arg0[%c0, %c0_0] : memref<16x128xf32, #tpu.memory_space<vmem>>, vector<16x128xf32>
    %1 = tpu.iota {dimensions = array<i32: 1>} : vector<1x128xi32>
    %c8_i32 = arith.constant 8 : i32
    %2 = vector.broadcast %c8_i32 : i32 to vector<1x128xi32>
    %3 = arith.cmpi slt, %1, %2 : vector<1x128xi32>
    %4 = arith.extui %3 : vector<1x128xi1> to vector<1x128xi32>
    %5 = arith.sitofp %4 : vector<1x128xi32> to vector<1x128xf32>
    %c0_1 = arith.constant 0 : index
    %c2 = arith.constant 2 : index
    %6 = vector.load %arg5[%c0_1, %c2] : memref<32x4xf32, #tpu.memory_space<vmem>>, vector<16x1xf32>
    %7 = vector.broadcast %6 : vector<16x1xf32> to vector<16x128xf32>
    %8 = arith.mulf %0, %7 : vector<16x128xf32>
    %c0_2 = arith.constant 0 : index
    %c0_3 = arith.constant 0 : index
    %9 = vector.load %arg1[%c0_2, %c0_3] : memref<64x16xf32, #tpu.memory_space<vmem>>, vector<64x16xf32>
    %cst = arith.constant dense<0.000000e+00> : vector<64x128xf32>
    %10 = tpu.matmul %9, %8, %cst {dimension_numbers = #tpu.dot_dimension_numbers<[1], [0], [0], [1], [0, 0, 1, 1], [], []>} : vector<64x16xf32>, vector<16x128xf32>, vector<64x128xf32> -> vector<64x128xf32>
    %c0_4 = arith.constant 0 : index
    %c0_5 = arith.constant 0 : index
    %11 = vector.load %arg2[%c0_4, %c0_5] : memref<64x8xf32, #tpu.memory_space<vmem>>, vector<64x1xf32>
    %12 = vector.broadcast %11 : vector<64x1xf32> to vector<64x128xf32>
    %13 = arith.addf %10, %12 : vector<64x128xf32>
    %cst_6 = arith.constant 0.000000e+00 : f32
    %14 = vector.broadcast %cst_6 : f32 to vector<64x128xf32>
    %15 = arith.maximumf %13, %14 : vector<64x128xf32>
    %c0_7 = arith.constant 0 : index
    %c1 = arith.constant 1 : index
    %16 = vector.load %arg2[%c0_7, %c1] : memref<64x8xf32, #tpu.memory_space<vmem>>, vector<64x1xf32>
    %c0_8 = arith.constant 0 : index
    %c2_9 = arith.constant 2 : index
    %17 = vector.load %arg2[%c0_8, %c2_9] : memref<64x8xf32, #tpu.memory_space<vmem>>, vector<64x1xf32>
    %18 = vector.broadcast %5 : vector<1x128xf32> to vector<64x128xf32>
    %19 = arith.mulf %15, %18 : vector<64x128xf32>
    %cst_10 = arith.constant dense<0.000000e+00> : vector<64xf32>
    %20 = vector.multi_reduction <add>, %19, %cst_10 [1] : vector<64x128xf32> to vector<64xf32>
    %21 = vector.shape_cast %20 : vector<64xf32> to vector<64x1xf32>
    %cst_11 = arith.constant 1.250000e-01 : f32
    %22 = vector.broadcast %cst_11 : f32 to vector<64x1xf32>
    %23 = arith.mulf %21, %22 : vector<64x1xf32>
    %24 = vector.broadcast %23 : vector<64x1xf32> to vector<64x128xf32>
    %25 = arith.subf %15, %24 : vector<64x128xf32>
    %26 = vector.broadcast %5 : vector<1x128xf32> to vector<64x128xf32>
    %27 = arith.mulf %25, %26 : vector<64x128xf32>
    %28 = arith.mulf %27, %27 : vector<64x128xf32>
    %cst_12 = arith.constant dense<0.000000e+00> : vector<64xf32>
    %29 = vector.multi_reduction <add>, %28, %cst_12 [1] : vector<64x128xf32> to vector<64xf32>
    %30 = vector.shape_cast %29 : vector<64xf32> to vector<64x1xf32>
    %cst_13 = arith.constant 1.250000e-01 : f32
    %31 = vector.broadcast %cst_13 : f32 to vector<64x1xf32>
    %32 = arith.mulf %30, %31 : vector<64x1xf32>
    %33 = vector.broadcast %23 : vector<64x1xf32> to vector<64x128xf32>
    %34 = arith.subf %15, %33 : vector<64x128xf32>
    %cst_14 = arith.constant 9.99999974E-6 : f32
    %35 = vector.broadcast %cst_14 : f32 to vector<64x1xf32>
    %36 = arith.addf %32, %35 : vector<64x1xf32>
    %37 = math.rsqrt %36 : vector<64x1xf32>
    %38 = vector.broadcast %37 : vector<64x1xf32> to vector<64x128xf32>
    %39 = arith.mulf %34, %38 : vector<64x128xf32>
    %40 = vector.broadcast %16 : vector<64x1xf32> to vector<64x128xf32>
    %41 = arith.mulf %39, %40 : vector<64x128xf32>
    %42 = vector.broadcast %17 : vector<64x1xf32> to vector<64x128xf32>
    %43 = arith.addf %41, %42 : vector<64x128xf32>
    %c0_15 = arith.constant 0 : index
    %c0_16 = arith.constant 0 : index
    %44 = vector.load %arg3[%c0_15, %c0_16] : memref<64x64xf32, #tpu.memory_space<vmem>>, vector<64x64xf32>
    %cst_17 = arith.constant dense<0.000000e+00> : vector<64x128xf32>
    %45 = tpu.matmul %44, %43, %cst_17 {dimension_numbers = #tpu.dot_dimension_numbers<[1], [0], [0], [1], [0, 0, 1, 1], [], []>} : vector<64x64xf32>, vector<64x128xf32>, vector<64x128xf32> -> vector<64x128xf32>
    %c0_18 = arith.constant 0 : index
    %c3 = arith.constant 3 : index
    %46 = vector.load %arg2[%c0_18, %c3] : memref<64x8xf32, #tpu.memory_space<vmem>>, vector<64x1xf32>
    %47 = vector.broadcast %46 : vector<64x1xf32> to vector<64x128xf32>
    %48 = arith.addf %45, %47 : vector<64x128xf32>
    %cst_19 = arith.constant 0.000000e+00 : f32
    %49 = vector.broadcast %cst_19 : f32 to vector<64x128xf32>
    %50 = arith.maximumf %48, %49 : vector<64x128xf32>
    %c0_20 = arith.constant 0 : index
    %c4 = arith.constant 4 : index
    %51 = vector.load %arg2[%c0_20, %c4] : memref<64x8xf32, #tpu.memory_space<vmem>>, vector<64x1xf32>
    %c0_21 = arith.constant 0 : index
    %c5 = arith.constant 5 : index
    %52 = vector.load %arg2[%c0_21, %c5] : memref<64x8xf32, #tpu.memory_space<vmem>>, vector<64x1xf32>
    %53 = vector.broadcast %5 : vector<1x128xf32> to vector<64x128xf32>
    %54 = arith.mulf %50, %53 : vector<64x128xf32>
    %cst_22 = arith.constant dense<0.000000e+00> : vector<64xf32>
    %55 = vector.multi_reduction <add>, %54, %cst_22 [1] : vector<64x128xf32> to vector<64xf32>
    %56 = vector.shape_cast %55 : vector<64xf32> to vector<64x1xf32>
    %cst_23 = arith.constant 1.250000e-01 : f32
    %57 = vector.broadcast %cst_23 : f32 to vector<64x1xf32>
    %58 = arith.mulf %56, %57 : vector<64x1xf32>
    %59 = vector.broadcast %58 : vector<64x1xf32> to vector<64x128xf32>
    %60 = arith.subf %50, %59 : vector<64x128xf32>
    %61 = vector.broadcast %5 : vector<1x128xf32> to vector<64x128xf32>
    %62 = arith.mulf %60, %61 : vector<64x128xf32>
    %63 = arith.mulf %62, %62 : vector<64x128xf32>
    %cst_24 = arith.constant dense<0.000000e+00> : vector<64xf32>
    %64 = vector.multi_reduction <add>, %63, %cst_24 [1] : vector<64x128xf32> to vector<64xf32>
    %65 = vector.shape_cast %64 : vector<64xf32> to vector<64x1xf32>
    %cst_25 = arith.constant 1.250000e-01 : f32
    %66 = vector.broadcast %cst_25 : f32 to vector<64x1xf32>
    %67 = arith.mulf %65, %66 : vector<64x1xf32>
    %68 = vector.broadcast %58 : vector<64x1xf32> to vector<64x128xf32>
    %69 = arith.subf %50, %68 : vector<64x128xf32>
    %cst_26 = arith.constant 9.99999974E-6 : f32
    %70 = vector.broadcast %cst_26 : f32 to vector<64x1xf32>
    %71 = arith.addf %67, %70 : vector<64x1xf32>
    %72 = math.rsqrt %71 : vector<64x1xf32>
    %73 = vector.broadcast %72 : vector<64x1xf32> to vector<64x128xf32>
    %74 = arith.mulf %69, %73 : vector<64x128xf32>
    %75 = vector.broadcast %51 : vector<64x1xf32> to vector<64x128xf32>
    %76 = arith.mulf %74, %75 : vector<64x128xf32>
    %77 = vector.broadcast %52 : vector<64x1xf32> to vector<64x128xf32>
    %78 = arith.addf %76, %77 : vector<64x128xf32>
    %c0_27 = arith.constant 0 : index
    %c0_28 = arith.constant 0 : index
    %79 = vector.load %arg5[%c0_27, %c0_28] : memref<32x4xf32, #tpu.memory_space<vmem>>, vector<32x1xf32>
    %c0_29 = arith.constant 0 : index
    %c1_30 = arith.constant 1 : index
    %80 = vector.load %arg5[%c0_29, %c1_30] : memref<32x4xf32, #tpu.memory_space<vmem>>, vector<16x1xf32>
    %c0_31 = arith.constant 0 : index
    %c0_32 = arith.constant 0 : index
    %81 = vector.load %arg4[%c0_31, %c0_32] : memref<32x64xf32, #tpu.memory_space<vmem>>, vector<32x64xf32>
    %cst_33 = arith.constant dense<0.000000e+00> : vector<32x128xf32>
    %82 = tpu.matmul %81, %78, %cst_33 {dimension_numbers = #tpu.dot_dimension_numbers<[1], [0], [0], [1], [0, 0, 1, 1], [], []>} : vector<32x64xf32>, vector<64x128xf32>, vector<32x128xf32> -> vector<32x128xf32>
    %83 = vector.broadcast %79 : vector<32x1xf32> to vector<32x128xf32>
    %84 = arith.addf %82, %83 : vector<32x128xf32>
    %85 = vector.extract_strided_slice %84 {offsets = [0, 0], sizes = [16, 128], strides = [1, 1]} : vector<32x128xf32> to vector<16x128xf32>
    %86 = vector.extract_strided_slice %84 {offsets = [16, 0], sizes = [16, 128], strides = [1, 1]} : vector<32x128xf32> to vector<16x128xf32>
    %cst_34 = arith.constant 1.000000e+00 : f32
    %87 = vector.broadcast %cst_34 : f32 to vector<16x1xf32>
    %88 = arith.subf %87, %6 : vector<16x1xf32>
    %89 = math.tanh %85 : vector<16x128xf32>
    %90 = vector.broadcast %80 : vector<16x1xf32> to vector<16x128xf32>
    %91 = arith.mulf %89, %90 : vector<16x128xf32>
    %92 = vector.broadcast %88 : vector<16x1xf32> to vector<16x128xf32>
    %93 = arith.mulf %91, %92 : vector<16x128xf32>
    %94 = vector.broadcast %88 : vector<16x1xf32> to vector<16x128xf32>
    %95 = arith.mulf %86, %94 : vector<16x128xf32>
    %cst_35 = arith.constant 0.000000e+00 : f32
    %96 = vector.broadcast %cst_35 : f32 to vector<16x128xf32>
    %97 = arith.subf %96, %93 : vector<16x128xf32>
    %98 = math.exp %97 : vector<16x128xf32>
    %99 = arith.mulf %0, %98 : vector<16x128xf32>
    %100 = arith.subf %99, %95 : vector<16x128xf32>
    %c0_36 = arith.constant 0 : index
    %c0_37 = arith.constant 0 : index
    %101 = vector.load %arg6[%c0_36, %c0_37] : memref<16x128xf32, #tpu.memory_space<vmem>>, vector<16x128xf32>
    tpu.vector_store %arg6[%c0_36, %c0_37], %100 {strides = array<i32>} : memref<16x128xf32, #tpu.memory_space<vmem>>, vector<16x128xf32>,
    return
  }
}

</mosaic_0001>

<llo_original>
// kernel: tpu_custom_call.1
$region0: #{tpu_custom_call.1}
  #allocation0 [shape = 'u32[]', space=smem, size = 0x4, offset = 0x4, fixed_abs, tag = 'smem constant byte address 0x4 - core index']
  #allocation1 [shape = 'u32[144,128]{1,0:T(1,128)}', space=vmem, size = 0x12000, scoped, tag = 'internal scratch']
  %s0 = inlined_call_operand.vmem [shape: f32[16,128], index: 0, kind: input, shape index: {}]
  %s1 = inlined_call_operand.vmem [shape: f32[64,16], index: 1, kind: input, shape index: {}]
  %s2 = inlined_call_operand.vmem [shape: f32[64,8], index: 2, kind: input, shape index: {}]
  %s3 = inlined_call_operand.vmem [shape: f32[64,64], index: 3, kind: input, shape index: {}]
  %s4 = inlined_call_operand.vmem [shape: f32[32,64], index: 4, kind: input, shape index: {}]
  %s5 = inlined_call_operand.vmem [shape: f32[32,4], index: 5, kind: input, shape index: {}]
  %s6 = inlined_call_operand.hbm [shape: f32[16,128], index: 6, kind: output, shape index: {}]
  %s7 = sld [smem:[#allocation0]]
  $region34: #{tpu_custom_call.1} parent=0
    _
  %s9 = ssub.s32 1, %s7
  %s10 = scalar_select 0, %s9, %s7
  $region1: #{tpu_custom_call.1} parent=0
    #allocation2 [shape = 'u8[8192]{0}', space=vmem, size = 0x2000, scoped, tag = 'output window, operand 0, single buffered']
    #allocation3 [shape = 's32[1]{0}', space=sflag, size = 0x4, scoped, tag = 'scoped memory for tpu_custom_call.1']
    %11 = vsyncpa [#allocation3], 0
    // Predicated region
    $region2: #{tpu_custom_call.1} parent=1 // pred_check
      _
    $region3: #{tpu_custom_call.1} parent=1 // pred_check_branch
      %13 = sbr.rel (0) target = $region5
    $region4: #{tpu_custom_call.1} parent=1 // pred_region
      _
    $region5: #{tpu_custom_call.1} parent=1 // pred_fallthru
      _
    // Predicated region
    $region6: #{tpu_custom_call.1} parent=1 // pred_check
      _
    $region7: #{tpu_custom_call.1} parent=1 // pred_check_branch
      %15 = sbr.rel (0) target = $region9
    $region8: #{tpu_custom_call.1} parent=1 // pred_region
      _
    $region9: #{tpu_custom_call.1} parent=1 // pred_fallthru
      _
    // Predicated region
    $region10: #{tpu_custom_call.1} parent=1 // pred_check
      _
    $region11: #{tpu_custom_call.1} parent=1 // pred_check_branch
      %17 = sbr.rel (0) target = $region13
    $region12: #{tpu_custom_call.1} parent=1 // pred_region
      _
    $region13: #{tpu_custom_call.1} parent=1 // pred_fallthru
      _
    // Predicated region
    $region14: #{tpu_custom_call.1} parent=1 // pred_check
      _
    $region15: #{tpu_custom_call.1} parent=1 // pred_check_branch
      %19 = sbr.rel (0) target = $region17
    $region16: #{tpu_custom_call.1} parent=1 // pred_region
      _
    $region17: #{tpu_custom_call.1} parent=1 // pred_fallthru
      _
    // Predicated region
    $region18: #{tpu_custom_call.1} parent=1 // pred_check
      _
    $region19: #{tpu_custom_call.1} parent=1 // pred_check_branch
      %21 = sbr.rel (0) target = $region21
    $region20: #{tpu_custom_call.1} parent=1 // pred_region
      _
    $region21: #{tpu_custom_call.1} parent=1 // pred_fallthru
      _
    // Predicated region
    $region22: #{tpu_custom_call.1} parent=1 // pred_check
      _
    $region23: #{tpu_custom_call.1} parent=1 // pred_check_branch
      %23 = sbr.rel (0) target = $region25
    $region24: #{tpu_custom_call.1} parent=1 // pred_region
      _
    $region25: #{tpu_custom_call.1} parent=1 // pred_fallthru
      _
    %v24 = vld [vmem:[%s0] sm:$0xff]
    %v25 = vld [vmem:[%s0 + $0x8] sm:$0xff]
    %v26 = vlaneseq
    %v27 = vand.u32 %v26, 127
    %vm28 = vcmp.lt.s32.totalorder %v27, 8
    %v29 = vsel %vm28, 1, 0
    %v30 = vcvt.s32.f32 %v29
    %v31 = vld [vmem:[%s5] sm:$0xff]
    %v32 = vld [vmem:[%s5 + $0x8] sm:$0xff]
    %34 = vset.pattern.permute.xlu0 2
    %35 = vperm.xlu0 %34, %v31
    %v36 = vpop.permute.xlu0 %35
    %39 = vset.pattern.permute.xlu0 2
    %40 = vperm.xlu0 %39, %v32
    %v41 = vpop.permute.xlu0 %40
    %v43 = vmul.f32 %v24, %v36
    %v44 = vmul.f32 %v25, %v41
    %v45 = vld [vmem:[%s1] sm:$0xff]
    %v46 = vld [vmem:[%s1 + $0x8] sm:$0xff]
    %v47 = vld [vmem:[%s1 + $0x10] sm:$0xff]
    %v48 = vld [vmem:[%s1 + $0x18] sm:$0xff]
    %v49 = vld [vmem:[%s1 + $0x20] sm:$0xff]
    %v50 = vld [vmem:[%s1 + $0x28] sm:$0xff]
    %v51 = vld [vmem:[%s1 + $0x30] sm:$0xff]
    %v52 = vld [vmem:[%s1 + $0x38] sm:$0xff]
    %v53 = vld [vmem:[%s2] sm:$0xff]
    %v54 = vld [vmem:[%s2 + $0x8] sm:$0xff]
    %v55 = vld [vmem:[%s2 + $0x10] sm:$0xff]
    %v56 = vld [vmem:[%s2 + $0x18] sm:$0xff]
    %v57 = vld [vmem:[%s2 + $0x20] sm:$0xff]
    %v58 = vld [vmem:[%s2 + $0x28] sm:$0xff]
    %v59 = vld [vmem:[%s2 + $0x30] sm:$0xff]
    %v60 = vld [vmem:[%s2 + $0x38] sm:$0xff]
    %62 = vset.pattern.permute.xlu0 0
    %63 = vperm.xlu0 %62, %v53
    %v64 = vpop.permute.xlu0 %63
    %67 = vset.pattern.permute.xlu0 0
    %68 = vperm.xlu0 %67, %v54
    %v69 = vpop.permute.xlu0 %68
    %72 = vset.pattern.permute.xlu0 0
    %73 = vperm.xlu0 %72, %v55
    %v74 = vpop.permute.xlu0 %73
    %77 = vset.pattern.permute.xlu0 0
    %78 = vperm.xlu0 %77, %v56
    %v79 = vpop.permute.xlu0 %78
    %82 = vset.pattern.permute.xlu0 0
    %83 = vperm.xlu0 %82, %v57
    %v84 = vpop.permute.xlu0 %83
    %87 = vset.pattern.permute.xlu0 0
    %88 = vperm.xlu0 %87, %v58
    %v89 = vpop.permute.xlu0 %88
    %92 = vset.pattern.permute.xlu0 0
    %93 = vperm.xlu0 %92, %v59
    %v94 = vpop.permute.xlu0 %93
    %97 = vset.pattern.permute.xlu0 0
    %98 = vperm.xlu0 %97, %v60
    %v99 = vpop.permute.xlu0 %98
    %vm101 = vcmask 130048
    %v103 = vsel %vm101, %v45, 0
    %v106 = vsel %vm101, %v46, 0
    %v109 = vsel %vm101, %v47, 0
    %v112 = vsel %vm101, %v48, 0
    %v115 = vsel %vm101, %v49, 0
    %v118 = vsel %vm101, %v50, 0
    %v121 = vsel %vm101, %v51, 0
    %v124 = vsel %vm101, %v52, 0
    %126 = vmatprep.subr.mxu0 0.0
    %127 = vmatpush1.msra.mxu0 0.0
    %128 = vmatprep.subr.mxu0 0.0
    %129 = vmatpush1.msra.mxu0 0.0
    %130 = vmatprep.subr.mxu0 0.0
    %131 = vmatpush1.msra.mxu0 0.0
    %132 = vmatprep.subr.mxu0 0.0
    %133 = vmatpush1.msra.mxu0 0.0
    %134 = vmatprep.subr.mxu0 0.0
    %135 = vmatpush1.msra.mxu0 0.0
    %136 = vmatprep.subr.mxu0 0.0
    %137 = vmatpush1.msra.mxu0 0.0
    %138 = vmatprep.subr.mxu0 0.0
    %139 = vmatpush1.msra.mxu0 0.0
    %140 = vmatprep.subr.mxu0 0.0
    %141 = vmatpush1.msra.mxu0 0.0
    %142 = vmatprep.subr.mxu0 0.0
    %143 = vmatpush1.msra.mxu0 0.0
    %144 = vmatprep.subr.mxu0 0.0
    %145 = vmatpush1.msra.mxu0 0.0
    %146 = vmatprep.subr.mxu0 0.0
    %147 = vmatpush1.msra.mxu0 0.0
    %148 = vmatprep.subr.mxu0 0.0
    %149 = vmatpush1.msra.mxu0 0.0
    %150 = vmatprep.subr.mxu0 0.0
    %151 = vmatpush1.msra.mxu0 0.0
    %152 = vmatprep.subr.mxu0 0.0
    %153 = vmatpush1.msra.mxu0 0.0
    %154 = vmatprep.subr.mxu0 0.0
    %155 = vmatpush1.msra.mxu0 %v44
    %156 = vmatprep.subr.mxu0 0.0
    %157 = vmatpush1.msra.mxu0 %v43
    %158 = vmatprep.subr.mxu0 0.0
    %159 = vmatpush2.msra.mxu0 0.0
    %160 = vmatprep.subr.mxu0 0.0
    %161 = vmatpush2.msra.mxu0 0.0
    %162 = vmatprep.subr.mxu0 0.0
    %163 = vmatpush2.msra.mxu0 0.0
    %164 = vmatprep.subr.mxu0 0.0
    %165 = vmatpush2.msra.mxu0 0.0
    %166 = vmatprep.subr.mxu0 0.0
    %167 = vmatpush2.msra.mxu0 0.0
    %168 = vmatprep.subr.mxu0 0.0
    %169 = vmatpush2.msra.mxu0 0.0
    %170 = vmatprep.subr.mxu0 0.0
    %171 = vmatpush2.msra.mxu0 0.0
    %172 = vmatprep.subr.mxu0 0.0
    %173 = vmatpush2.msra.mxu0 0.0
    %174 = vmatprep.subr.mxu0 0.0
    %175 = vmatpush2.msra.mxu0 0.0
    %176 = vmatprep.subr.mxu0 0.0
    %177 = vmatpush2.msra.mxu0 0.0
    %178 = vmatprep.subr.mxu0 0.0
    %179 = vmatpush2.msra.mxu0 0.0
    %180 = vmatprep.subr.mxu0 0.0
    %181 = vmatpush2.msra.mxu0 0.0
    %182 = vmatprep.subr.mxu0 0.0
    %183 = vmatpush2.msra.mxu0 0.0
    %184 = vmatprep.subr.mxu0 0.0
    %185 = vmatpush2.msra.mxu0 0.0
    %186 = vmatprep.subr.mxu0 0.0
    %187 = vmatpush2.msra.mxu0 0.0
    %188 = vmatprep.subr.mxu0 0.0
    %189 = vmatpush2.msra.mxu0 0.0
    %190 = vmatprep.mubr.f32.mxu0 0.0
    %191 = vmatmul.mubr.f32.gmra.mxu0 %v103
    %v192 = vpop.f32.mrf.mxu0
    %v193 = vadd.f32 %v64, %v192
    %v194 = vpop.f32.mrf.mxu0
    %195 = vmatprep.mubr.f32.mxu0 0.0
    %196 = vmatmul.mubr.f32.gmra.mxu0 %v106
    %v197 = vpop.f32.mrf.mxu0
    %v198 = vadd.f32 %v69, %v197
    %v199 = vpop.f32.mrf.mxu0
    %200 = vmatprep.mubr.f32.mxu0 0.0
    %201 = vmatmul.mubr.f32.gmra.mxu0 %v109
    %v202 = vpop.f32.mrf.mxu0
    %v203 = vadd.f32 %v74, %v202
    %v204 = vpop.f32.mrf.mxu0
    %205 = vmatprep.mubr.f32.mxu0 0.0
    %206 = vmatmul.mubr.f32.gmra.mxu0 %v112
    %v207 = vpop.f32.mrf.mxu0
    %v208 = vadd.f32 %v79, %v207
    %v209 = vpop.f32.mrf.mxu0
    %210 = vmatprep.mubr.f32.mxu0 0.0
    %211 = vmatmul.mubr.f32.gmra.mxu0 %v115
    %v212 = vpop.f32.mrf.mxu0
    %v213 = vadd.f32 %v84, %v212
    %v214 = vpop.f32.mrf.mxu0
    %215 = vmatprep.mubr.f32.mxu0 0.0
    %216 = vmatmul.mubr.f32.gmra.mxu0 %v118
    %v217 = vpop.f32.mrf.mxu0
    %v218 = vadd.f32 %v89, %v217
    %v219 = vpop.f32.mrf.mxu0
    %220 = vmatprep.mubr.f32.mxu0 0.0
    %221 = vmatmul.mubr.f32.gmra.mxu0 %v121
    %v222 = vpop.f32.mrf.mxu0
    %v223 = vadd.f32 %v94, %v222
    %v224 = vpop.f32.mrf.mxu0
    %225 = vmatprep.mubr.f32.mxu0 0.0
    %226 = vmatmul.mubr.f32.gmra.mxu0 %v124
    %v227 = vpop.f32.mrf.mxu0
    %v228 = vadd.f32 %v99, %v227
    %v229 = vpop.f32.mrf.mxu0
    %230 = vdwg.mxu0
    %v231 = vmax.f32 %v193, 0.0
    %v232 = vmax.f32 %v198, 0.0
    %v233 = vmax.f32 %v203, 0.0
    %v234 = vmax.f32 %v208, 0.0
    %v235 = vmax.f32 %v213, 0.0
    %v236 = vmax.f32 %v218, 0.0
    %v237 = vmax.f32 %v223, 0.0
    %v238 = vmax.f32 %v228, 0.0
    %v239 = vmul.f32 %v231, %v30
    %v240 = vmul.f32 %v232, %v30
    %v241 = vmul.f32 %v233, %v30
    %v242 = vmul.f32 %v234, %v30
    %v243 = vmul.f32 %v235, %v30
    %v244 = vmul.f32 %v236, %v30
    %v245 = vmul.f32 %v237, %v30
    %v246 = vmul.f32 %v238, %v30
    %247 = vadd.xlane.f32.xlu0 %v239
    %v248 = vpop.xlane.xlu0 %247
    %249 = vadd.xlane.f32.xlu0 %v240
    %v250 = vpop.xlane.xlu0 %249
    %251 = vadd.xlane.f32.xlu0 %v241
    %v252 = vpop.xlane.xlu0 %251
    %253 = vadd.xlane.f32.xlu0 %v242
    %v254 = vpop.xlane.xlu0 %253
    %255 = vadd.xlane.f32.xlu0 %v243
    %v256 = vpop.xlane.xlu0 %255
    %257 = vadd.xlane.f32.xlu0 %v244
    %v258 = vpop.xlane.xlu0 %257
    %259 = vadd.xlane.f32.xlu0 %v245
    %v260 = vpop.xlane.xlu0 %259
    %261 = vadd.xlane.f32.xlu0 %v246
    %v262 = vpop.xlane.xlu0 %261
    %v263 = vmul.f32 %v248, 0.125
    %v264 = vmul.f32 %v250, 0.125
    %v265 = vmul.f32 %v252, 0.125
    %v266 = vmul.f32 %v254, 0.125
    %v267 = vmul.f32 %v256, 0.125
    %v268 = vmul.f32 %v258, 0.125
    %v269 = vmul.f32 %v260, 0.125
    %v270 = vmul.f32 %v262, 0.125
    %v271 = vsub.f32 %v231, %v263
    %v272 = vsub.f32 %v232, %v264
    %v273 = vsub.f32 %v233, %v265
    %v274 = vsub.f32 %v234, %v266
    %v275 = vsub.f32 %v235, %v267
    %v276 = vsub.f32 %v236, %v268
    %v277 = vsub.f32 %v237, %v269
    %v278 = vsub.f32 %v238, %v270
    %v279 = vmul.f32 %v271, %v30
    %v280 = vmul.f32 %v272, %v30
    %v281 = vmul.f32 %v273, %v30
    %v282 = vmul.f32 %v274, %v30
    %v283 = vmul.f32 %v275, %v30
    %v284 = vmul.f32 %v276, %v30
    %v285 = vmul.f32 %v277, %v30
    %v286 = vmul.f32 %v278, %v30
    %v287 = vmul.f32 %v279, %v279
    %v288 = vmul.f32 %v280, %v280
    %v289 = vmul.f32 %v281, %v281
    %v290 = vmul.f32 %v282, %v282
    %v291 = vmul.f32 %v283, %v283
    %v292 = vmul.f32 %v284, %v284
    %v293 = vmul.f32 %v285, %v285
    %v294 = vmul.f32 %v286, %v286
    %295 = vadd.xlane.f32.xlu0 %v287
    %v296 = vpop.xlane.xlu0 %295
    %297 = vadd.xlane.f32.xlu0 %v288
    %v298 = vpop.xlane.xlu0 %297
    %299 = vadd.xlane.f32.xlu0 %v289
    %v300 = vpop.xlane.xlu0 %299
    %301 = vadd.xlane.f32.xlu0 %v290
    %v302 = vpop.xlane.xlu0 %301
    %303 = vadd.xlane.f32.xlu0 %v291
    %v304 = vpop.xlane.xlu0 %303
    %305 = vadd.xlane.f32.xlu0 %v292
    %v306 = vpop.xlane.xlu0 %305
    %307 = vadd.xlane.f32.xlu0 %v293
    %v308 = vpop.xlane.xlu0 %307
    %309 = vadd.xlane.f32.xlu0 %v294
    %v310 = vpop.xlane.xlu0 %309
    %v311 = vmul.f32 %v296, 0.125
    %v312 = vmul.f32 %v298, 0.125
    %v313 = vmul.f32 %v300, 0.125
    %v314 = vmul.f32 %v302, 0.125
    %v315 = vmul.f32 %v304, 0.125
    %v316 = vmul.f32 %v306, 0.125
    %v317 = vmul.f32 %v308, 0.125
    %v318 = vmul.f32 %v310, 0.125
    %v319 = vadd.f32 %v311, 1e-05
    %v320 = vadd.f32 %v312, 1e-05
    %v321 = vadd.f32 %v313, 1e-05
    %v322 = vadd.f32 %v314, 1e-05
    %v323 = vadd.f32 %v315, 1e-05
    %v324 = vadd.f32 %v316, 1e-05
    %v325 = vadd.f32 %v317, 1e-05
    %v326 = vadd.f32 %v318, 1e-05
    %v327 = vrsqrt.pop %v319
    %v328 = vrsqrt.pop %v320
    %v329 = vrsqrt.pop %v321
    %v330 = vrsqrt.pop %v322
    %v331 = vrsqrt.pop %v323
    %v332 = vrsqrt.pop %v324
    %v333 = vrsqrt.pop %v325
    %v334 = vrsqrt.pop %v326
    %v335 = vmul.f32 %v271, %v327
    %v336 = vmul.f32 %v272, %v328
    %v337 = vmul.f32 %v273, %v329
    %v338 = vmul.f32 %v274, %v330
    %v339 = vmul.f32 %v275, %v331
    %v340 = vmul.f32 %v276, %v332
    %v341 = vmul.f32 %v277, %v333
    %v342 = vmul.f32 %v278, %v334
    %343 = vset.pattern.permute.xlu0 1
    %344 = vperm.xlu0 %343, %v53
    %v345 = vpop.permute.xlu0 %344
    %347 = vset.pattern.permute.xlu0 1
    %348 = vperm.xlu0 %347, %v54
    %v349 = vpop.permute.xlu0 %348
    %351 = vset.pattern.permute.xlu0 1
    %352 = vperm.xlu0 %351, %v55
    %v353 = vpop.permute.xlu0 %352
    %355 = vset.pattern.permute.xlu0 1
    %356 = vperm.xlu0 %355, %v56
    %v357 = vpop.permute.xlu0 %356
    %359 = vset.pattern.permute.xlu0 1
    %360 = vperm.xlu0 %359, %v57
    %v361 = vpop.permute.xlu0 %360
    %363 = vset.pattern.permute.xlu0 1
    %364 = vperm.xlu0 %363, %v58
    %v365 = vpop.permute.xlu0 %364
    %367 = vset.pattern.permute.xlu0 1
    %368 = vperm.xlu0 %367, %v59
    %v369 = vpop.permute.xlu0 %368
    %371 = vset.pattern.permute.xlu0 1
    %372 = vperm.xlu0 %371, %v60
    %v373 = vpop.permute.xlu0 %372
    %v375 = vmul.f32 %v335, %v345
    %v376 = vmul.f32 %v336, %v349
    %v377 = vmul.f32 %v337, %v353
    %v378 = vmul.f32 %v338, %v357
    %v379 = vmul.f32 %v339, %v361
    %v380 = vmul.f32 %v340, %v365
    %v381 = vmul.f32 %v341, %v369
    %v382 = vmul.f32 %v342, %v373
    %383 = vset.pattern.permute.xlu0 2
    %384 = vperm.xlu0 %383, %v53
    %v385 = vpop.permute.xlu0 %384
    %387 = vset.pattern.permute.xlu0 2
    %388 = vperm.xlu0 %387, %v54
    %v389 = vpop.permute.xlu0 %388
    %391 = vset.pattern.permute.xlu0 2
    %392 = vperm.xlu0 %391, %v55
    %v393 = vpop.permute.xlu0 %392
    %395 = vset.pattern.permute.xlu0 2
    %396 = vperm.xlu0 %395, %v56
    %v397 = vpop.permute.xlu0 %396
    %399 = vset.pattern.permute.xlu0 2
    %400 = vperm.xlu0 %399, %v57
    %v401 = vpop.permute.xlu0 %400
    %403 = vset.pattern.permute.xlu0 2
    %404 = vperm.xlu0 %403, %v58
    %v405 = vpop.permute.xlu0 %404
    %407 = vset.pattern.permute.xlu0 2
    %408 = vperm.xlu0 %407, %v59
    %v409 = vpop.permute.xlu0 %408
    %411 = vset.pattern.permute.xlu0 2
    %412 = vperm.xlu0 %411, %v60
    %v413 = vpop.permute.xlu0 %412
    %v415 = vadd.f32 %v375, %v385
    %v416 = vadd.f32 %v376, %v389
    %v417 = vadd.f32 %v377, %v393
    %v418 = vadd.f32 %v378, %v397
    %v419 = vadd.f32 %v379, %v401
    %v420 = vadd.f32 %v380, %v405
    %v421 = vadd.f32 %v381, %v409
    %v422 = vadd.f32 %v382, %v413
    %v423 = vld [vmem:[%s3] sm:$0xff]
    %v424 = vld [vmem:[%s3 + $0x8] sm:$0xff]
    %v425 = vld [vmem:[%s3 + $0x10] sm:$0xff]
    %v426 = vld [vmem:[%s3 + $0x18] sm:$0xff]
    %v427 = vld [vmem:[%s3 + $0x20] sm:$0xff]
    %v428 = vld [vmem:[%s3 + $0x28] sm:$0xff]
    %v429 = vld [vmem:[%s3 + $0x30] sm:$0xff]
    %v430 = vld [vmem:[%s3 + $0x38] sm:$0xff]
    %431 = vset.pattern.permute.xlu0 3
    %432 = vperm.xlu0 %431, %v53
    %v433 = vpop.permute.xlu0 %432
    %435 = vset.pattern.permute.xlu0 3
    %436 = vperm.xlu0 %435, %v54
    %v437 = vpop.permute.xlu0 %436
    %439 = vset.pattern.permute.xlu0 3
    %440 = vperm.xlu0 %439, %v55
    %v441 = vpop.permute.xlu0 %440
    %443 = vset.pattern.permute.xlu0 3
    %444 = vperm.xlu0 %443, %v56
    %v445 = vpop.permute.xlu0 %444
    %447 = vset.pattern.permute.xlu0 3
    %448 = vperm.xlu0 %447, %v57
    %v449 = vpop.permute.xlu0 %448
    %451 = vset.pattern.permute.xlu0 3
    %452 = vperm.xlu0 %451, %v58
    %v453 = vpop.permute.xlu0 %452
    %455 = vset.pattern.permute.xlu0 3
    %456 = vperm.xlu0 %455, %v59
    %v457 = vpop.permute.xlu0 %456
    %459 = vset.pattern.permute.xlu0 3
    %460 = vperm.xlu0 %459, %v60
    %v461 = vpop.permute.xlu0 %460
    %vm463 = vcmask 523264
    %v465 = vsel %vm463, %v423, 0
    %v468 = vsel %vm463, %v424, 0
    %v471 = vsel %vm463, %v425, 0
    %v474 = vsel %vm463, %v426, 0
    %v477 = vsel %vm463, %v427, 0
    %v480 = vsel %vm463, %v428, 0
    %v483 = vsel %vm463, %v429, 0
    %v486 = vsel %vm463, %v430, 0
    %488 = vmatprep.subr.mxu0 0.0
    %489 = vmatpush1.msra.mxu0 0.0
    %490 = vmatprep.subr.mxu0 0.0
    %491 = vmatpush1.msra.mxu0 0.0
    %492 = vmatprep.subr.mxu0 0.0
    %493 = vmatpush1.msra.mxu0 0.0
    %494 = vmatprep.subr.mxu0 0.0
    %495 = vmatpush1.msra.mxu0 0.0
    %496 = vmatprep.subr.mxu0 0.0
    %497 = vmatpush1.msra.mxu0 0.0
    %498 = vmatprep.subr.mxu0 0.0
    %499 = vmatpush1.msra.mxu0 0.0
    %500 = vmatprep.subr.mxu0 0.0
    %501 = vmatpush1.msra.mxu0 0.0
    %502 = vmatprep.subr.mxu0 0.0
    %503 = vmatpush1.msra.mxu0 0.0
    %504 = vmatprep.subr.mxu0 0.0
    %505 = vmatpush1.msra.mxu0 %v422
    %506 = vmatprep.subr.mxu0 0.0
    %507 = vmatpush1.msra.mxu0 %v421
    %508 = vmatprep.subr.mxu0 0.0
    %509 = vmatpush1.msra.mxu0 %v420
    %510 = vmatprep.subr.mxu0 0.0
    %511 = vmatpush1.msra.mxu0 %v419
    %512 = vmatprep.subr.mxu0 0.0
    %513 = vmatpush1.msra.mxu0 %v418
    %514 = vmatprep.subr.mxu0 0.0
    %515 = vmatpush1.msra.mxu0 %v417
    %516 = vmatprep.subr.mxu0 0.0
    %517 = vmatpush1.msra.mxu0 %v416
    %518 = vmatprep.subr.mxu0 0.0
    %519 = vmatpush1.msra.mxu0 %v415
    %520 = vmatprep.subr.mxu0 0.0
    %521 = vmatpush2.msra.mxu0 0.0
    %522 = vmatprep.subr.mxu0 0.0
    %523 = vmatpush2.msra.mxu0 0.0
    %524 = vmatprep.subr.mxu0 0.0
    %525 = vmatpush2.msra.mxu0 0.0
    %526 = vmatprep.subr.mxu0 0.0
    %527 = vmatpush2.msra.mxu0 0.0
    %528 = vmatprep.subr.mxu0 0.0
    %529 = vmatpush2.msra.mxu0 0.0
    %530 = vmatprep.subr.mxu0 0.0
    %531 = vmatpush2.msra.mxu0 0.0
    %532 = vmatprep.subr.mxu0 0.0
    %533 = vmatpush2.msra.mxu0 0.0
    %534 = vmatprep.subr.mxu0 0.0
    %535 = vmatpush2.msra.mxu0 0.0
    %536 = vmatprep.subr.mxu0 0.0
    %537 = vmatpush2.msra.mxu0 0.0
    %538 = vmatprep.subr.mxu0 0.0
    %539 = vmatpush2.msra.mxu0 0.0
    %540 = vmatprep.subr.mxu0 0.0
    %541 = vmatpush2.msra.mxu0 0.0
    %542 = vmatprep.subr.mxu0 0.0
    %543 = vmatpush2.msra.mxu0 0.0
    %544 = vmatprep.subr.mxu0 0.0
    %545 = vmatpush2.msra.mxu0 0.0
    %546 = vmatprep.subr.mxu0 0.0
    %547 = vmatpush2.msra.mxu0 0.0
    %548 = vmatprep.subr.mxu0 0.0
    %549 = vmatpush2.msra.mxu0 0.0
    %550 = vmatprep.subr.mxu0 0.0
    %551 = vmatpush2.msra.mxu0 0.0
    %552 = vmatprep.mubr.f32.mxu0 0.0
    %553 = vmatmul.mubr.f32.gmra.mxu0 %v465
    %v554 = vpop.f32.mrf.mxu0
    %v555 = vadd.f32 %v433, %v554
    %v556 = vpop.f32.mrf.mxu0
    %557 = vmatprep.mubr.f32.mxu0 0.0
    %558 = vmatmul.mubr.f32.gmra.mxu0 %v468
    %v559 = vpop.f32.mrf.mxu0
    %v560 = vadd.f32 %v437, %v559
    %v561 = vpop.f32.mrf.mxu0
    %562 = vmatprep.mubr.f32.mxu0 0.0
    %563 = vmatmul.mubr.f32.gmra.mxu0 %v471
    %v564 = vpop.f32.mrf.mxu0
    %v565 = vadd.f32 %v441, %v564
    %v566 = vpop.f32.mrf.mxu0
    %567 = vmatprep.mubr.f32.mxu0 0.0
    %568 = vmatmul.mubr.f32.gmra.mxu0 %v474
    %v569 = vpop.f32.mrf.mxu0
    %v570 = vadd.f32 %v445, %v569
    %v571 = vpop.f32.mrf.mxu0
    %572 = vmatprep.mubr.f32.mxu0 0.0
    %573 = vmatmul.mubr.f32.gmra.mxu0 %v477
    %v574 = vpop.f32.mrf.mxu0
    %v575 = vadd.f32 %v449, %v574
    %v576 = vpop.f32.mrf.mxu0
    %577 = vmatprep.mubr.f32.mxu0 0.0
    %578 = vmatmul.mubr.f32.gmra.mxu0 %v480
    %v579 = vpop.f32.mrf.mxu0
    %v580 = vadd.f32 %v453, %v579
    %v581 = vpop.f32.mrf.mxu0
    %582 = vmatprep.mubr.f32.mxu0 0.0
    %583 = vmatmul.mubr.f32.gmra.mxu0 %v483
    %v584 = vpop.f32.mrf.mxu0
    %v585 = vadd.f32 %v457, %v584
    %v586 = vpop.f32.mrf.mxu0
    %587 = vmatprep.mubr.f32.mxu0 0.0
    %588 = vmatmul.mubr.f32.gmra.mxu0 %v486
    %v589 = vpop.f32.mrf.mxu0
    %v590 = vadd.f32 %v461, %v589
    %v591 = vpop.f32.mrf.mxu0
    %592 = vdwg.mxu0
    %v593 = vmax.f32 %v555, 0.0
    %v594 = vmax.f32 %v560, 0.0
    %v595 = vmax.f32 %v565, 0.0
    %v596 = vmax.f32 %v570, 0.0
    %v597 = vmax.f32 %v575, 0.0
    %v598 = vmax.f32 %v580, 0.0
    %v599 = vmax.f32 %v585, 0.0
    %v600 = vmax.f32 %v590, 0.0
    %v601 = vmul.f32 %v593, %v30
    %v602 = vmul.f32 %v594, %v30
    %v603 = vmul.f32 %v595, %v30
    %v604 = vmul.f32 %v596, %v30
    %v605 = vmul.f32 %v597, %v30
    %v606 = vmul.f32 %v598, %v30
    %v607 = vmul.f32 %v599, %v30
    %v608 = vmul.f32 %v600, %v30
    %609 = vadd.xlane.f32.xlu0 %v601
    %v610 = vpop.xlane.xlu0 %609
    %611 = vadd.xlane.f32.xlu0 %v602
    %v612 = vpop.xlane.xlu0 %611
    %613 = vadd.xlane.f32.xlu0 %v603
    %v614 = vpop.xlane.xlu0 %613
    %615 = vadd.xlane.f32.xlu0 %v604
    %v616 = vpop.xlane.xlu0 %615
    %617 = vadd.xlane.f32.xlu0 %v605
    %v618 = vpop.xlane.xlu0 %617
    %619 = vadd.xlane.f32.xlu0 %v606
    %v620 = vpop.xlane.xlu0 %619
    %621 = vadd.xlane.f32.xlu0 %v607
    %v622 = vpop.xlane.xlu0 %621
    %623 = vadd.xlane.f32.xlu0 %v608
    %v624 = vpop.xlane.xlu0 %623
    %v625 = vmul.f32 %v610, 0.125
    %v626 = vmul.f32 %v612, 0.125
    %v627 = vmul.f32 %v614, 0.125
    %v628 = vmul.f32 %v616, 0.125
    %v629 = vmul.f32 %v618, 0.125
    %v630 = vmul.f32 %v620, 0.125
    %v631 = vmul.f32 %v622, 0.125
    %v632 = vmul.f32 %v624, 0.125
    %v633 = vsub.f32 %v593, %v625
    %v634 = vsub.f32 %v594, %v626
    %v635 = vsub.f32 %v595, %v627
    %v636 = vsub.f32 %v596, %v628
    %v637 = vsub.f32 %v597, %v629
    %v638 = vsub.f32 %v598, %v630
    %v639 = vsub.f32 %v599, %v631
    %v640 = vsub.f32 %v600, %v632
    %v641 = vmul.f32 %v633, %v30
    %v642 = vmul.f32 %v634, %v30
    %v643 = vmul.f32 %v635, %v30
    %v644 = vmul.f32 %v636, %v30
    %v645 = vmul.f32 %v637, %v30
    %v646 = vmul.f32 %v638, %v30
    %v647 = vmul.f32 %v639, %v30
    %v648 = vmul.f32 %v640, %v30
    %v649 = vmul.f32 %v641, %v641
    %v650 = vmul.f32 %v642, %v642
    %v651 = vmul.f32 %v643, %v643
    %v652 = vmul.f32 %v644, %v644
    %v653 = vmul.f32 %v645, %v645
    %v654 = vmul.f32 %v646, %v646
    %v655 = vmul.f32 %v647, %v647
    %v656 = vmul.f32 %v648, %v648
    %657 = vadd.xlane.f32.xlu0 %v649
    %v658 = vpop.xlane.xlu0 %657
    %659 = vadd.xlane.f32.xlu0 %v650
    %v660 = vpop.xlane.xlu0 %659
    %661 = vadd.xlane.f32.xlu0 %v651
    %v662 = vpop.xlane.xlu0 %661
    %663 = vadd.xlane.f32.xlu0 %v652
    %v664 = vpop.xlane.xlu0 %663
    %665 = vadd.xlane.f32.xlu0 %v653
    %v666 = vpop.xlane.xlu0 %665
    %667 = vadd.xlane.f32.xlu0 %v654
    %v668 = vpop.xlane.xlu0 %667
    %669 = vadd.xlane.f32.xlu0 %v655
    %v670 = vpop.xlane.xlu0 %669
    %671 = vadd.xlane.f32.xlu0 %v656
    %v672 = vpop.xlane.xlu0 %671
    %v673 = vmul.f32 %v658, 0.125
    %v674 = vmul.f32 %v660, 0.125
    %v675 = vmul.f32 %v662, 0.125
    %v676 = vmul.f32 %v664, 0.125
    %v677 = vmul.f32 %v666, 0.125
    %v678 = vmul.f32 %v668, 0.125
    %v679 = vmul.f32 %v670, 0.125
    %v680 = vmul.f32 %v672, 0.125
    %v681 = vadd.f32 %v673, 1e-05
    %v682 = vadd.f32 %v674, 1e-05
    %v683 = vadd.f32 %v675, 1e-05
    %v684 = vadd.f32 %v676, 1e-05
    %v685 = vadd.f32 %v677, 1e-05
    %v686 = vadd.f32 %v678, 1e-05
    %v687 = vadd.f32 %v679, 1e-05
    %v688 = vadd.f32 %v680, 1e-05
    %v689 = vrsqrt.pop %v681
    %v690 = vrsqrt.pop %v682
    %v691 = vrsqrt.pop %v683
    %v692 = vrsqrt.pop %v684
    %v693 = vrsqrt.pop %v685
    %v694 = vrsqrt.pop %v686
    %v695 = vrsqrt.pop %v687
    %v696 = vrsqrt.pop %v688
    %v697 = vmul.f32 %v633, %v689
    %v698 = vmul.f32 %v634, %v690
    %v699 = vmul.f32 %v635, %v691
    %v700 = vmul.f32 %v636, %v692
    %v701 = vmul.f32 %v637, %v693
    %v702 = vmul.f32 %v638, %v694
    %v703 = vmul.f32 %v639, %v695
    %v704 = vmul.f32 %v640, %v696
    %705 = vset.pattern.permute.xlu0 4
    %706 = vperm.xlu0 %705, %v53
    %v707 = vpop.permute.xlu0 %706
    %709 = vset.pattern.permute.xlu0 4
    %710 = vperm.xlu0 %709, %v54
    %v711 = vpop.permute.xlu0 %710
    %713 = vset.pattern.permute.xlu0 4
    %714 = vperm.xlu0 %713, %v55
    %v715 = vpop.permute.xlu0 %714
    %717 = vset.pattern.permute.xlu0 4
    %718 = vperm.xlu0 %717, %v56
    %v719 = vpop.permute.xlu0 %718
    %721 = vset.pattern.permute.xlu0 4
    %722 = vperm.xlu0 %721, %v57
    %v723 = vpop.permute.xlu0 %722
    %725 = vset.pattern.permute.xlu0 4
    %726 = vperm.xlu0 %725, %v58
    %v727 = vpop.permute.xlu0 %726
    %729 = vset.pattern.permute.xlu0 4
    %730 = vperm.xlu0 %729, %v59
    %v731 = vpop.permute.xlu0 %730
    %733 = vset.pattern.permute.xlu0 4
    %734 = vperm.xlu0 %733, %v60
    %v735 = vpop.permute.xlu0 %734
    %v737 = vmul.f32 %v697, %v707
    %v738 = vmul.f32 %v698, %v711
    %v739 = vmul.f32 %v699, %v715
    %v740 = vmul.f32 %v700, %v719
    %v741 = vmul.f32 %v701, %v723
    %v742 = vmul.f32 %v702, %v727
    %v743 = vmul.f32 %v703, %v731
    %v744 = vmul.f32 %v704, %v735
    %745 = vset.pattern.permute.xlu0 5
    %746 = vperm.xlu0 %745, %v53
    %v747 = vpop.permute.xlu0 %746
    %749 = vset.pattern.permute.xlu0 5
    %750 = vperm.xlu0 %749, %v54
    %v751 = vpop.permute.xlu0 %750
    %753 = vset.pattern.permute.xlu0 5
    %754 = vperm.xlu0 %753, %v55
    %v755 = vpop.permute.xlu0 %754
    %757 = vset.pattern.permute.xlu0 5
    %758 = vperm.xlu0 %757, %v56
    %v759 = vpop.permute.xlu0 %758
    %761 = vset.pattern.permute.xlu0 5
    %762 = vperm.xlu0 %761, %v57
    %v763 = vpop.permute.xlu0 %762
    %765 = vset.pattern.permute.xlu0 5
    %766 = vperm.xlu0 %765, %v58
    %v767 = vpop.permute.xlu0 %766
    %769 = vset.pattern.permute.xlu0 5
    %770 = vperm.xlu0 %769, %v59
    %v771 = vpop.permute.xlu0 %770
    %773 = vset.pattern.permute.xlu0 5
    %774 = vperm.xlu0 %773, %v60
    %v775 = vpop.permute.xlu0 %774
    %v777 = vadd.f32 %v737, %v747
    %v778 = vadd.f32 %v738, %v751
    %v779 = vadd.f32 %v739, %v755
    %v780 = vadd.f32 %v740, %v759
    %v781 = vadd.f32 %v741, %v763
    %v782 = vadd.f32 %v742, %v767
    %v783 = vadd.f32 %v743, %v771
    %v784 = vadd.f32 %v744, %v775
    %v785 = vld [vmem:[%s5] sm:$0xff]
    %v786 = vld [vmem:[%s5 + $0x8] sm:$0xff]
    %v787 = vld [vmem:[%s5 + $0x10] sm:$0xff]
    %v788 = vld [vmem:[%s5 + $0x18] sm:$0xff]
    %v789 = vld [vmem:[%s4] sm:$0xff]
    %v790 = vld [vmem:[%s4 + $0x8] sm:$0xff]
    %v791 = vld [vmem:[%s4 + $0x10] sm:$0xff]
    %v792 = vld [vmem:[%s4 + $0x18] sm:$0xff]
    %794 = vset.pattern.permute.xlu0 0
    %795 = vperm.xlu0 %794, %v785
    %v796 = vpop.permute.xlu0 %795
    %799 = vset.pattern.permute.xlu0 0
    %800 = vperm.xlu0 %799, %v786
    %v801 = vpop.permute.xlu0 %800
    %804 = vset.pattern.permute.xlu0 0
    %805 = vperm.xlu0 %804, %v787
    %v806 = vpop.permute.xlu0 %805
    %809 = vset.pattern.permute.xlu0 0
    %810 = vperm.xlu0 %809, %v788
    %v811 = vpop.permute.xlu0 %810
    %v814 = vsel %vm463, %v789, 0
    %v817 = vsel %vm463, %v790, 0
    %v820 = vsel %vm463, %v791, 0
    %v823 = vsel %vm463, %v792, 0
    %825 = vmatprep.subr.mxu0 0.0
    %826 = vmatpush1.msra.mxu0 0.0
    %827 = vmatprep.subr.mxu0 0.0
    %828 = vmatpush1.msra.mxu0 0.0
    %829 = vmatprep.subr.mxu0 0.0
    %830 = vmatpush1.msra.mxu0 0.0
    %831 = vmatprep.subr.mxu0 0.0
    %832 = vmatpush1.msra.mxu0 0.0
    %833 = vmatprep.subr.mxu0 0.0
    %834 = vmatpush1.msra.mxu0 0.0
    %835 = vmatprep.subr.mxu0 0.0
    %836 = vmatpush1.msra.mxu0 0.0
    %837 = vmatprep.subr.mxu0 0.0
    %838 = vmatpush1.msra.mxu0 0.0
    %839 = vmatprep.subr.mxu0 0.0
    %840 = vmatpush1.msra.mxu0 0.0
    %841 = vmatprep.subr.mxu0 0.0
    %842 = vmatpush1.msra.mxu0 %v784
    %843 = vmatprep.subr.mxu0 0.0
    %844 = vmatpush1.msra.mxu0 %v783
    %845 = vmatprep.subr.mxu0 0.0
    %846 = vmatpush1.msra.mxu0 %v782
    %847 = vmatprep.subr.mxu0 0.0
    %848 = vmatpush1.msra.mxu0 %v781
    %849 = vmatprep.subr.mxu0 0.0
    %850 = vmatpush1.msra.mxu0 %v780
    %851 = vmatprep.subr.mxu0 0.0
    %852 = vmatpush1.msra.mxu0 %v779
    %853 = vmatprep.subr.mxu0 0.0
    %854 = vmatpush1.msra.mxu0 %v778
    %855 = vmatprep.subr.mxu0 0.0
    %856 = vmatpush1.msra.mxu0 %v777
    %857 = vmatprep.subr.mxu0 0.0
    %858 = vmatpush2.msra.mxu0 0.0
    %859 = vmatprep.subr.mxu0 0.0
    %860 = vmatpush2.msra.mxu0 0.0
    %861 = vmatprep.subr.mxu0 0.0
    %862 = vmatpush2.msra.mxu0 0.0
    %863 = vmatprep.subr.mxu0 0.0
    %864 = vmatpush2.msra.mxu0 0.0
    %865 = vmatprep.subr.mxu0 0.0
    %866 = vmatpush2.msra.mxu0 0.0
    %867 = vmatprep.subr.mxu0 0.0
    %868 = vmatpush2.msra.mxu0 0.0
    %869 = vmatprep.subr.mxu0 0.0
    %870 = vmatpush2.msra.mxu0 0.0
    %871 = vmatprep.subr.mxu0 0.0
    %872 = vmatpush2.msra.mxu0 0.0
    %873 = vmatprep.subr.mxu0 0.0
    %874 = vmatpush2.msra.mxu0 0.0
    %875 = vmatprep.subr.mxu0 0.0
    %876 = vmatpush2.msra.mxu0 0.0
    %877 = vmatprep.subr.mxu0 0.0
    %878 = vmatpush2.msra.mxu0 0.0
    %879 = vmatprep.subr.mxu0 0.0
    %880 = vmatpush2.msra.mxu0 0.0
    %881 = vmatprep.subr.mxu0 0.0
    %882 = vmatpush2.msra.mxu0 0.0
    %883 = vmatprep.subr.mxu0 0.0
    %884 = vmatpush2.msra.mxu0 0.0
    %885 = vmatprep.subr.mxu0 0.0
    %886 = vmatpush2.msra.mxu0 0.0
    %887 = vmatprep.subr.mxu0 0.0
    %888 = vmatpush2.msra.mxu0 0.0
    %889 = vmatprep.mubr.f32.mxu0 0.0
    %890 = vmatmul.mubr.f32.gmra.mxu0 %v814
    %v891 = vpop.f32.mrf.mxu0
    %v892 = vadd.f32 %v796, %v891
    %v893 = vpop.f32.mrf.mxu0
    %894 = vmatprep.mubr.f32.mxu0 0.0
    %895 = vmatmul.mubr.f32.gmra.mxu0 %v817
    %v896 = vpop.f32.mrf.mxu0
    %v897 = vadd.f32 %v801, %v896
    %v898 = vpop.f32.mrf.mxu0
    %899 = vmatprep.mubr.f32.mxu0 0.0
    %900 = vmatmul.mubr.f32.gmra.mxu0 %v820
    %v901 = vpop.f32.mrf.mxu0
    %v902 = vadd.f32 %v806, %v901
    %v903 = vpop.f32.mrf.mxu0
    %904 = vmatprep.mubr.f32.mxu0 0.0
    %905 = vmatmul.mubr.f32.gmra.mxu0 %v823
    %v906 = vpop.f32.mrf.mxu0
    %v907 = vadd.f32 %v811, %v906
    %v908 = vpop.f32.mrf.mxu0
    %909 = vdwg.mxu0
    %v910 = vsub.f32 1.0, %v31
    %v911 = vsub.f32 1.0, %v32
    %v912 = vtanh.pop %v892
    %v913 = vtanh.pop %v897
    %914 = vset.pattern.permute.xlu0 1
    %915 = vperm.xlu0 %914, %v31
    %v916 = vpop.permute.xlu0 %915
    %918 = vset.pattern.permute.xlu0 1
    %919 = vperm.xlu0 %918, %v32
    %v920 = vpop.permute.xlu0 %919
    %v922 = vmul.f32 %v912, %v916
    %v923 = vmul.f32 %v913, %v920
    %925 = vset.pattern.permute.xlu0 2
    %926 = vperm.xlu0 %925, %v910
    %v927 = vpop.permute.xlu0 %926
    %930 = vset.pattern.permute.xlu0 2
    %931 = vperm.xlu0 %930, %v911
    %v932 = vpop.permute.xlu0 %931
    %v934 = vmul.f32 %v922, %v927
    %v935 = vmul.f32 %v923, %v932
    %v936 = vmul.f32 %v902, %v927
    %v937 = vmul.f32 %v907, %v932
    %v938 = vsub.f32 0.0, %v934
    %v939 = vsub.f32 0.0, %v935
    %v940 = vmul.f32 %v938, 1.442695
    %v941 = vpow.pop %v940
    %v942 = vmul.f32 %v939, 1.442695
    %v943 = vpow.pop %v942
    %v944 = vmul.f32 %v24, %v941
    %v945 = vmul.f32 %v25, %v943
    %v946 = vsub.f32 %v944, %v936
    %v947 = vsub.f32 %v945, %v937
    %948 = vst [vmem:[#allocation2] sm:$0xff] %v946
    %949 = vst [vmem:[#allocation2 + $0x8] sm:$0xff] %v947
    // Predicated region
    $region26: #{tpu_custom_call.1} parent=1 // pred_check
      _
    $region27: #{tpu_custom_call.1} parent=1 // pred_check_branch
      %951 = sbr.rel (0) target = $region29
    $region28: #{tpu_custom_call.1} parent=1 // pred_region
      %s953 = ssub.s32 256, 256
      %954 = vsyncadd [#allocation3], %s953
      %s955 = sshll.u32 [#allocation2], 4
      %s956 = int_to_ptr.vmem [resolvable:$true] %s955
      %961 = dma.vmem_to_hbm [thread:$0]  %s956, 256, %s6, [#allocation3], 128, 128, 8
    $region29: #{tpu_custom_call.1} parent=1 // pred_fallthru
      _
    // Predicated region
    $region30: #{tpu_custom_call.1} parent=1 // pred_check
      _
    $region31: #{tpu_custom_call.1} parent=1 // pred_check_branch
      %963 = sbr.rel (0) target = $region33
    $region32: #{tpu_custom_call.1} parent=1 // pred_region
      %964 = dma.done [#allocation3], 256
    $region33: #{tpu_custom_call.1} parent=1 // pred_fallthru
      _
    %965 = vsyncpa [#allocation3], 1

</llo_original>
